<compile_context>
chip_gen: v7x
topology: tpu7x:2x2x1
jax: 0.10.0
libtpu: 0.0.40
codegen_flags: <defaults>
</compile_context>

<pallas_src>
import functools
import math

import jax
import jax.numpy as jnp
from jax.experimental import pallas as pl
from jax.experimental.pallas import tpu as pltpu


# ----------------------------- tiling heuristics ------------------------------

_RESIDENT_W_BYTES = 6 * 1024 * 1024     # keep the whole weight VMEM-resident below this
_VMEM_BUDGET = 44 * 1024 * 1024         # per-call VMEM budget (safe on v7x's 64 MiB)


def _round_up(x, m):
    return (x + m - 1) // m * m


def _pick_bk(K):
    if K % 128 != 0:
        return K                       # block == full dim (legal), e.g. stem K=196 / C=64
    for cand in (1024, 512, 256, 128):
        if K % cand == 0:
            return cand
    return K


def _pick_bn(N):
    if N % 128 != 0:
        return N                       # block == full dim (legal), e.g. 64 or the 3-class head
    for cand in (512, 256, 128):
        if N % cand == 0:
            return cand
    return N


# ----------------------------- Pallas matmul kernel ------------------------------

def _matmul_kernel(a_ref, b_ref, shift_ref, *refs, relu, has_res):
    """acc = / += a @ b over the K grid axis; on the last K step apply
    shift (+ residual) (+ ReLU) and write the output tile."""
    if has_res:
        res_ref, o_ref, acc_ref = refs
    else:
        o_ref, acc_ref = refs
        res_ref = None

    k = pl.program_id(2)
    prod = jnp.dot(a_ref[...], b_ref[...], preferred_element_type=jnp.float32)

    @pl.when(k == 0)
    def _():
        acc_ref[...] = prod            # first K step writes directly (no zero pass)

    @pl.when(k > 0)
    def _():
        acc_ref[...] += prod

    @pl.when(k == pl.num_programs(2) - 1)
    def _():
        y = acc_ref[...] + shift_ref[...]
        if has_res:
            y = y + res_ref[...].astype(jnp.float32)
        if relu:
            y = jnp.maximum(y, 0.0)
        o_ref[...] = y.astype(o_ref.dtype)


def matmul_bn_act(a, wp, relu, residual=None, out_dtype=jnp.bfloat16):
    """act((a @ w) + shift [+ residual]).

    a: [M, K] (cast to bf16). wp: prepared weight dict with 'w' [K, N] bf16 (BN scale
    folded in) and 'shift' [1, N] f32. residual (optional): [M, N], fused (bf16).
    Ragged M / N handled with cdiv grids + masked writes (no host-side pad copies).
    """
    M, K = a.shape
    Kw, N = wp['w'].shape
    assert Kw == K, (Kw, K)

    BM = min(512, _round_up(M, 8))
    if K * N * 2 <= _RESIDENT_W_BYTES:
        BK, BN = K, N                  # weight fully VMEM-resident, fetched once
    else:
        BK, BN = _pick_bk(K), _pick_bn(N)

    a = a.astype(jnp.bfloat16)
    has_res = residual is not None

    in_arrays = [a, wp['w'], wp['shift']]
    in_specs = [
        pl.BlockSpec((BM, BK), lambda i, j, k: (i, k)),
        pl.BlockSpec((BK, BN), lambda i, j, k: (k, j)),
        pl.BlockSpec((1, BN), lambda i, j, k: (0, j)),
    ]
    if has_res:
        in_arrays.append(residual.astype(jnp.bfloat16))
        in_specs.append(pl.BlockSpec((BM, BN), lambda i, j, k: (i, j)))

    est = (2 * BM * BK * 2 + 2 * BK * BN * 2
           + 2 * BM * BN * jnp.dtype(out_dtype).itemsize
           + BM * BN * 4 + (2 * BM * BN * 2 if has_res else 0))
    vmem_limit = int(min(max(32 * 2**20, int(est * 1.5)), 64 * 2**20))

    return pl.pallas_call(
        functools.partial(_matmul_kernel, relu=relu, has_res=has_res),
        out_shape=jax.ShapeDtypeStruct((M, N), out_dtype),
        grid_spec=pltpu.PrefetchScalarGridSpec(
            num_scalar_prefetch=0,
            grid=(pl.cdiv(M, BM), pl.cdiv(N, BN), pl.cdiv(K, BK)),
            in_specs=in_specs,
            out_specs=pl.BlockSpec((BM, BN), lambda i, j, k: (i, j)),
            scratch_shapes=[pltpu.VMEM((BM, BN), jnp.float32)],
        ),
        compiler_params=pltpu.CompilerParams(
            dimension_semantics=("parallel", "parallel", "arbitrary"),
            vmem_limit_bytes=vmem_limit),
    )(*in_arrays)


# ----------------------------- Pallas direct-conv kernel ------------------------------

def _direct_conv_kernel(a_ref, w_ref, shift_ref, o_ref, acc_ref, *,
                        tap_offsets, m_rows, relu):
    """Stride-1 conv as a sum of tap matmuls over the flattened padded image.

    a_ref: (1, Hp*Wp, BK) bf16 padded image rows (channel block).
    w_ref: (T, BK, BN)    bf16 per-tap weights.
    acc  : (m_rows, BN)   f32 accumulator over taps and channel blocks.
    """
    kc = pl.program_id(2)

    for t, off in enumerate(tap_offsets):
        a_t = a_ref[0, off:off + m_rows, :]
        prod = jnp.dot(a_t, w_ref[t], preferred_element_type=jnp.float32)
        if t == 0:
            @pl.when(kc == 0)
            def _():
                acc_ref[...] = prod

            @pl.when(kc > 0)
            def _():
                acc_ref[...] += prod
        else:
            acc_ref[...] += prod

    @pl.when(kc == pl.num_programs(2) - 1)
    def _():
        y = acc_ref[...] + shift_ref[...]
        if relu:
            y = jnp.maximum(y, 0.0)
        o_ref[0, :, :] = y.astype(o_ref.dtype)


def conv2d_direct(x, wp, k, padding, dilation, relu):
    """Stride-1 KxK conv without HBM im2col. Returns None if it would not fit VMEM."""
    N, H, W, C = x.shape
    OH = H + 2 * padding - dilation * (k - 1)
    OW = W + 2 * padding - dilation * (k - 1)
    Cout = wp['n']
    if OH <= 0 or OW <= 0:
        return None

    # Contributing taps (offsets relative to the unpadded input); skip taps that only
    # ever read the zero padding (e.g. ASPP rate-36 taps on a small feature map).
    taps = []
    for i in range(k):
        for j in range(k):
            ri = i * dilation - padding
            cj = j * dilation - padding
            if ri + OH - 1 < 0 or ri > H - 1:
                continue
            if cj + OW - 1 < 0 or cj > W - 1:
                continue
            taps.append((i * k + j, ri, cj))
    if not taps:
        return None

    min_ri = min(t[1] for t in taps); max_ri = max(t[1] for t in taps)
    min_cj = min(t[2] for t in taps); max_cj = max(t[2] for t in taps)
    pt = max(0, -min_ri)
    pb = max(0, max_ri + OH - 1 - (H - 1))
    pleft = max(0, -min_cj)
    pright = max(0, max_cj + OW - 1 - (W - 1))
    Wp = W + pleft + pright
    extra = 1 if (max_cj + pleft) > 0 else 0     # row spill for the column offsets
    Hp = H + pt + pb + extra
    T = len(taps)
    m_rows = OH * Wp                             # output computed on the padded-width grid
    tap_offsets = tuple((ri + pt) * Wp + (cj + pleft) for _, ri, cj in taps)

    def footprint(bk, bn):
        return (2 * Hp * Wp * bk * 2 + 2 * T * bk * bn * 2
                + 2 * m_rows * bn * 2 + m_rows * bn * 4)

    bk_cands = [c for c in (C, 1024, 512, 256, 128) if c <= C and C % c == 0]
    bn_cands = [c for c in (Cout, 512, 256, 128) if c <= Cout and Cout % c == 0]
    BK = BN = None
    for bk in bk_cands:
        for bn in bn_cands:
            if footprint(bk, bn) <= _VMEM_BUDGET:
                BK, BN = bk, bn
                break
        if BK is not None:
            break
    if BK is None:
        return None                              # too large for VMEM -> im2col fallback

    w_full = wp['w'].reshape(k * k, C, Cout)     # free reshape of the flat weight
    if T == k * k:
        w_taps = w_full
    else:
        w_taps = w_full[jnp.array([t[0] for t in taps], dtype=jnp.int32)]

    x_p = x.astype(jnp.bfloat16)
    if pt or (pb + extra) or pleft or pright:
        x_p = jnp.pad(x_p, ((0, 0), (pt, pb + extra), (pleft, pright), (0, 0)))
    a = x_p.reshape(N, Hp * Wp, C)

    fp = footprint(BK, BN)
    vmem_limit = int(min(max(32 * 2**20, int(fp * 1.4) + (1 << 20)), 64 * 2**20))

    out = pl.pallas_call(
        functools.partial(_direct_conv_kernel, tap_offsets=tap_offsets,
                          m_rows=m_rows, relu=relu),
        out_shape=jax.ShapeDtypeStruct((N, m_rows, Cout), jnp.bfloat16),
        grid_spec=pltpu.PrefetchScalarGridSpec(
            num_scalar_prefetch=0,
            grid=(N, pl.cdiv(Cout, BN), pl.cdiv(C, BK)),
            in_specs=[
                pl.BlockSpec((1, Hp * Wp, BK), lambda n, j, c: (n, 0, c)),
                pl.BlockSpec((T, BK, BN), lambda n, j, c: (0, c, j)),
                pl.BlockSpec((1, BN), lambda n, j, c: (0, j)),
            ],
            out_specs=pl.BlockSpec((1, m_rows, BN), lambda n, j, c: (n, 0, j)),
            scratch_shapes=[pltpu.VMEM((m_rows, BN), jnp.float32)],
        ),
        compiler_params=pltpu.CompilerParams(
            dimension_semantics=("parallel", "parallel", "arbitrary"),
            vmem_limit_bytes=vmem_limit),
    )(a, w_taps, wp['shift'])

    out = out.reshape(N, OH, Wp, Cout)
    if Wp != OW:
        out = out[:, :, :OW, :]
    return out


# ------------------------------- conv helpers -------------------------------

def im2col(x, kh, kw, stride, padding, dilation):
    """x: NHWC -> patches [N*oh*ow, kh*kw*C] (offset-major, channel-minor)."""
    if padding > 0:
        x = jnp.pad(x, ((0, 0), (padding, padding), (padding, padding), (0, 0)))
    N, H, W, C = x.shape
    oh = (H - (kh - 1) * dilation - 1) // stride + 1
    ow = (W - (kw - 1) * dilation - 1) // stride + 1
    cols = []
    for i in range(kh):
        for j in range(kw):
            cols.append(x[:, i * dilation:i * dilation + stride * (oh - 1) + 1:stride,
                             j * dilation:j * dilation + stride * (ow - 1) + 1:stride, :])
    patches = jnp.stack(cols, axis=3)  # [N, oh, ow, kh*kw, C]
    return patches.reshape(N * oh * ow, kh * kw * C), oh, ow


def conv2d(x, wp, k, stride=1, padding=0, dilation=1, relu=True, residual=None,
           out_dtype=jnp.bfloat16):
    """x: NHWC, wp: prepared weight dict. Returns NHWC (bf16 by default)."""
    if k == 1:
        if stride > 1:
            x = x[:, ::stride, ::stride, :]
        N, oh, ow, C = x.shape
        a = x.reshape(N * oh * ow, C)
        res2d = residual.reshape(N * oh * ow, -1) if residual is not None else None
        out = matmul_bn_act(a, wp, relu, res2d, out_dtype)
        return out.reshape(N, oh, ow, -1)

    if stride == 1 and residual is None:
        out = conv2d_direct(x, wp, k, padding, dilation, relu)
        if out is not None:
            return out

    # Fallback (stride-2 convs: 7x7 stem, layer2 block0 conv2): bf16 im2col + matmul.
    N = x.shape[0]
    patches, oh, ow = im2col(x.astype(jnp.bfloat16), k, k, stride, padding, dilation)
    res2d = residual.reshape(N * oh * ow, -1) if residual is not None else None
    out = matmul_bn_act(patches, wp, relu, res2d, out_dtype)
    return out.reshape(N, oh, ow, -1)


def dense_small(x2d, wp, relu):
    """Tiny matmul (M = batch size, e.g. ASPP pooled branch) — plain JAX, not worth a
    single-tile Pallas call."""
    y = x2d.astype(jnp.float32) @ wp['w'].astype(jnp.float32) + wp['shift']
    if relu:
        y = jnp.maximum(y, 0.0)
    return y


def maxpool2d(x, k=3, stride=2, padding=1):
    x = jnp.pad(x, ((0, 0), (padding, padding), (padding, padding), (0, 0)),
                constant_values=-jnp.inf)
    N, H, W, C = x.shape
    oh = (H - k) // stride + 1
    ow = (W - k) // stride + 1
    vals = []
    for i in range(k):
        for j in range(k):
            vals.append(x[:, i:i + stride * (oh - 1) + 1:stride,
                             j:j + stride * (ow - 1) + 1:stride, :])
    return jnp.max(jnp.stack(vals, axis=0), axis=0)


def bilinear_resize(x, out_h, out_w):
    """torch F.interpolate(mode='bilinear', align_corners=False) on NHWC."""
    N, H, W, C = x.shape
    src_h = jnp.clip((jnp.arange(out_h, dtype=jnp.float32) + 0.5) * (H / out_h) - 0.5, 0.0, H - 1)
    src_w = jnp.clip((jnp.arange(out_w, dtype=jnp.float32) + 0.5) * (W / out_w) - 0.5, 0.0, W - 1)
    h0 = jnp.floor(src_h).astype(jnp.int32)
    w0 = jnp.floor(src_w).astype(jnp.int32)
    h1 = jnp.minimum(h0 + 1, H - 1)
    w1 = jnp.minimum(w0 + 1, W - 1)
    dh = (src_h - h0.astype(jnp.float32))[None, :, None, None]
    dw = (src_w - w0.astype(jnp.float32))[None, None, :, None]
    x_h0 = x[:, h0]
    x_h1 = x[:, h1]
    top = x_h0[:, :, w0] * (1 - dw) + x_h0[:, :, w1] * dw
    bot = x_h1[:, :, w0] * (1 - dw) + x_h1[:, :, w1] * dw
    return top * (1 - dh) + bot * dh


# --------------------------- parameter construction --------------------------

class ParamGen:
    def __init__(self, seed=0):
        self.key = jax.random.PRNGKey(seed)
        self.i = 0

    def normal(self, shape, std=1.0):
        self.i += 1
        return std * jax.random.normal(jax.random.fold_in(self.key, self.i), shape, jnp.float32)


def he_conv(pg, cin, cout, k):
    fan_in = k * k * cin
    return pg.normal((k * k * cin, cout), std=math.sqrt(2.0 / fan_in))


def make_bn(pg, c):
    return dict(gamma=1.0 + pg.normal((c,), 0.05),
                beta=pg.normal((c,), 0.05),
                mean=pg.normal((c,), 0.05),
                var=1.0 + jnp.abs(pg.normal((c,), 0.05)))


def prep_weight(w, shift):
    """Weight as bf16 [K, N] (MXU operand dtype), shift as f32 [1, N]; no padding."""
    return dict(w=w.astype(jnp.bfloat16),
                shift=shift.astype(jnp.float32).reshape(1, -1),
                n=w.shape[1])


def fold_conv_bn(w, bn, eps=1e-5):
    """Fold eval-mode BN into the conv weight (scale) + epilogue shift."""
    scale = bn['gamma'] / jnp.sqrt(bn['var'] + eps)
    shift = bn['beta'] - bn['mean'] * scale
    return prep_weight(w * scale[None, :], shift)


def make_bottleneck(pg, inplanes, planes, stride, dilation, downsample):
    p = dict(
        conv1=fold_conv_bn(he_conv(pg, inplanes, planes, 1), make_bn(pg, planes)),
        conv2=fold_conv_bn(he_conv(pg, planes, planes, 3), make_bn(pg, planes)),
        conv3=fold_conv_bn(he_conv(pg, planes, planes * 4, 1), make_bn(pg, planes * 4)),
        stride=stride, dilation=dilation,
    )
    if downsample:
        p['down'] = fold_conv_bn(he_conv(pg, inplanes, planes * 4, 1), make_bn(pg, planes * 4))
    return p


def make_backbone(pg, in_channels):
    # resnet50 with replace_stride_with_dilation=[False, True, True] (deeplabv3).
    params = dict(stem=fold_conv_bn(he_conv(pg, in_channels, 64, 7), make_bn(pg, 64)))
    inplanes, dilation = 64, 1
    layers = []
    for planes, blocks, stride, dilate in [(64, 3, 1, False), (128, 4, 2, False),
                                           (256, 6, 2, True), (512, 3, 2, True)]:
        prev_dilation = dilation
        if dilate:
            dilation *= stride
            stride = 1
        blk = [make_bottleneck(pg, inplanes, planes, stride, prev_dilation,
                               downsample=(stride != 1 or inplanes != planes * 4))]
        inplanes = planes * 4
        for _ in range(1, blocks):
            blk.append(make_bottleneck(pg, inplanes, planes, 1, dilation, False))
        layers.append(blk)
    params['layers'] = layers
    return params


def make_classifier(pg, in_channels, out_channels):
    rates = [12, 24, 36]
    return dict(
        aspp0=fold_conv_bn(he_conv(pg, in_channels, 256, 1), make_bn(pg, 256)),
        aspp_rates=rates,
        aspp_convs=[fold_conv_bn(he_conv(pg, in_channels, 256, 3), make_bn(pg, 256))
                    for _ in rates],
        pool=fold_conv_bn(he_conv(pg, in_channels, 256, 1), make_bn(pg, 256)),
        proj=fold_conv_bn(he_conv(pg, 5 * 256, 256, 1), make_bn(pg, 256)),
        head=fold_conv_bn(he_conv(pg, 256, 256, 3), make_bn(pg, 256)),
        final=prep_weight(pg.normal((256, out_channels), std=1.0 / math.sqrt(256.0)),
                          pg.normal((out_channels,), std=0.01)),
    )


# -------------------------------- forward pass -------------------------------

def bottleneck_forward(x, p):
    s, d = p['stride'], p['dilation']
    if 'down' in p:
        identity = conv2d(x, p['down'], k=1, stride=s, relu=False)
    else:
        identity = x
    out = conv2d(x, p['conv1'], k=1, relu=True)
    out = conv2d(out, p['conv2'], k=3, stride=s, padding=d, dilation=d, relu=True)
    # residual add + ReLU fused into the conv3 matmul epilogue (residual kept in bf16).
    out = conv2d(out, p['conv3'], k=1, relu=True, residual=identity)
    return out


def backbone_forward(x, params):
    x = conv2d(x, params['stem'], k=7, stride=2, padding=3, relu=True)
    x = maxpool2d(x, k=3, stride=2, padding=1)
    for blk in params['layers']:
        for p in blk:
            x = bottleneck_forward(x, p)
    return x  # 'out' feature (layer4), stride 8, 2048 channels, bf16


def classifier_forward(x, p):
    N, H, W, _ = x.shape
    branches = [conv2d(x, p['aspp0'], k=1, relu=True)]
    for rate, wp in zip(p['aspp_rates'], p['aspp_convs']):
        branches.append(conv2d(x, wp, k=3, padding=rate, dilation=rate, relu=True))
    pooled = jnp.mean(x.astype(jnp.float32), axis=(1, 2))              # AdaptiveAvgPool2d(1)
    pooled = dense_small(pooled, p['pool'], relu=True).astype(jnp.bfloat16)
    branches.append(jnp.broadcast_to(pooled[:, None, None, :],
                                     (N, H, W, pooled.shape[-1])))     # upsample of 1x1
    y = jnp.concatenate(branches, axis=-1)
    y = conv2d(y, p['proj'], k=1, relu=True)
    # TODO(synk): Dropout(0.5) in ASPP.project skipped (eval-mode identity).
    y = conv2d(y, p['head'], k=3, padding=1, relu=True)
    y = conv2d(y, p['final'], k=1, relu=False, out_dtype=jnp.float32)  # classifier[4], with bias
    return y


class DeeplabV3Pallas:
    def __init__(self, configs, seed=0):
        pg = ParamGen(seed)
        self.in_channels = configs['in_channels']
        self.out_channels = configs['out_channels']
        self.backbone = make_backbone(pg, self.in_channels)
        self.classifier = make_classifier(pg, 2048, self.out_channels)

    def __call__(self, x_nchw):
        N, C, H, W = x_nchw.shape
        x = jnp.transpose(x_nchw, (0, 2, 3, 1)).astype(jnp.float32)  # NCHW -> NHWC
        feat = backbone_forward(x, self.backbone)
        y = classifier_forward(feat, self.classifier)
        y = bilinear_resize(y.astype(jnp.float32), H, W)             # -> input resolution
        return jnp.transpose(y, (0, 3, 1, 2))                        # NHWC -> NCHW ('out')


# ------------------------------------ main -----------------------------------

if __name__ == "__main__":
    configs = {'in_channels': 4, 'out_channels': 3}
    model = DeeplabV3Pallas(configs, seed=0)

    key = jax.random.PRNGKey(0)
    x = jax.random.normal(key, (2, configs['in_channels'], 16, 16), jnp.float32)

    out = model(x)
    out = jax.block_until_ready(out)

    assert out.shape == (2, configs['out_channels'], 16, 16), out.shape
    assert out.dtype == jnp.float32
    assert bool(jnp.all(jnp.isfinite(out)))
    print("KERNEL_OK")
</pallas_src>

<mosaic_0001>
module attributes {stable_mosaic.version = 11 : i64} {
  func.func @_matmul_kernel(%arg0: i32, %arg1: i32, %arg2: i32, %arg3: memref<128x196xbf16, #tpu.memory_space<vmem>>, %arg4: memref<196x64xbf16, #tpu.memory_space<vmem>>, %arg5: memref<1x64xf32, #tpu.memory_space<vmem>>, %arg6: memref<128x64xbf16, #tpu.memory_space<vmem>>, %arg7: memref<128x64xf32, #tpu.memory_space<vmem>>) attributes {dimension_semantics = [#tpu.dimension_semantics<parallel>, #tpu.dimension_semantics<parallel>, #tpu.dimension_semantics<arbitrary>], iteration_bounds = array<i64: 1, 1, 1>, scalar_prefetch = 0 : i64, scratch_operands = 1 : i64, tpu.core_type = #tpu.core_type<tc>, window_params = [{transform_indices = @transform_0, window_bounds = array<i64: 128, 196>}, {transform_indices = @transform_1, window_bounds = array<i64: 196, 64>}, {transform_indices = @transform_2, window_bounds = array<i64: 1, 64>}, {transform_indices = @transform_3, window_bounds = array<i64: 128, 64>}]} {
    %c0 = arith.constant 0 : index
    %c0_0 = arith.constant 0 : index
    %0 = vector.load %arg3[%c0, %c0_0] : memref<128x196xbf16, #tpu.memory_space<vmem>>, vector<128x196xbf16>
    %c0_1 = arith.constant 0 : index
    %c0_2 = arith.constant 0 : index
    %1 = vector.load %arg4[%c0_1, %c0_2] : memref<196x64xbf16, #tpu.memory_space<vmem>>, vector<196x64xbf16>
    %cst = arith.constant dense<0.000000e+00> : vector<128x64xf32>
    %2 = tpu.matmul %0, %1, %cst {dimension_numbers = #tpu.dot_dimension_numbers<[1], [0], [0], [1], [0, 0, 1, 1], [], []>} : vector<128x196xbf16>, vector<196x64xbf16>, vector<128x64xf32> -> vector<128x64xf32>
    %c0_i32 = arith.constant 0 : i32
    %3 = arith.cmpi eq, %arg2, %c0_i32 : i32
    %4 = arith.extui %3 : i1 to i32
    %c0_i32_3 = arith.constant 0 : i32
    %5 = arith.cmpi ne, %4, %c0_i32_3 : i32
    scf.if %5 {
      %c0_8 = arith.constant 0 : index
      %c0_9 = arith.constant 0 : index
      %12 = vector.load %arg7[%c0_8, %c0_9] : memref<128x64xf32, #tpu.memory_space<vmem>>, vector<128x64xf32>
      tpu.vector_store %arg7[%c0_8, %c0_9], %2 {strides = array<i32>} : memref<128x64xf32, #tpu.memory_space<vmem>>, vector<128x64xf32>,
    } else {
    }
    %c0_i32_4 = arith.constant 0 : i32
    %6 = arith.cmpi sgt, %arg2, %c0_i32_4 : i32
    %7 = arith.extui %6 : i1 to i32
    %c0_i32_5 = arith.constant 0 : i32
    %8 = arith.cmpi ne, %7, %c0_i32_5 : i32
    scf.if %8 {
      %c0_8 = arith.constant 0 : index
      %c0_9 = arith.constant 0 : index
      %12 = vector.load %arg7[%c0_8, %c0_9] : memref<128x64xf32, #tpu.memory_space<vmem>>, vector<128x64xf32>
      %13 = arith.addf %12, %2 : vector<128x64xf32>
      %c0_10 = arith.constant 0 : index
      %c0_11 = arith.constant 0 : index
      %14 = vector.load %arg7[%c0_10, %c0_11] : memref<128x64xf32, #tpu.memory_space<vmem>>, vector<128x64xf32>
      tpu.vector_store %arg7[%c0_10, %c0_11], %13 {strides = array<i32>} : memref<128x64xf32, #tpu.memory_space<vmem>>, vector<128x64xf32>,
    } else {
    }
    %c0_i32_6 = arith.constant 0 : i32
    %9 = arith.cmpi eq, %arg2, %c0_i32_6 : i32
    %10 = arith.extui %9 : i1 to i32
    %c0_i32_7 = arith.constant 0 : i32
    %11 = arith.cmpi ne, %10, %c0_i32_7 : i32
    scf.if %11 {
      %c0_8 = arith.constant 0 : index
      %c0_9 = arith.constant 0 : index
      %12 = vector.load %arg7[%c0_8, %c0_9] : memref<128x64xf32, #tpu.memory_space<vmem>>, vector<128x64xf32>
      %c0_10 = arith.constant 0 : index
      %c0_11 = arith.constant 0 : index
      %13 = vector.load %arg5[%c0_10, %c0_11] : memref<1x64xf32, #tpu.memory_space<vmem>>, vector<1x64xf32>
      %14 = vector.broadcast %13 : vector<1x64xf32> to vector<128x64xf32>
      %15 = arith.addf %12, %14 : vector<128x64xf32>
      %cst_12 = arith.constant 0.000000e+00 : f32
      %16 = vector.broadcast %cst_12 : f32 to vector<128x64xf32>
      %17 = arith.maximumf %15, %16 : vector<128x64xf32>
      %18 = arith.truncf %17 : vector<128x64xf32> to vector<128x64xbf16>
      %c0_13 = arith.constant 0 : index
      %c0_14 = arith.constant 0 : index
      %19 = vector.load %arg6[%c0_13, %c0_14] : memref<128x64xbf16, #tpu.memory_space<vmem>>, vector<128x64xbf16>
      tpu.vector_store %arg6[%c0_13, %c0_14], %18 {strides = array<i32>} : memref<128x64xbf16, #tpu.memory_space<vmem>>, vector<128x64xbf16>,
    } else {
    }
    return
  }
  func.func @transform_0(%arg0: i32, %arg1: i32, %arg2: i32) -> (i32, i32) {
    %c0_i32 = arith.constant 0 : i32
    return %arg0, %arg2 : i32, i32
  }
  func.func @transform_1(%arg0: i32, %arg1: i32, %arg2: i32) -> (i32, i32) {
    %c0_i32 = arith.constant 0 : i32
    return %arg2, %arg1 : i32, i32
  }
  func.func @transform_2(%arg0: i32, %arg1: i32, %arg2: i32) -> (i32, i32) {
    %c0_i32 = arith.constant 0 : i32
    %c0_i32_0 = arith.constant 0 : i32
    return %c0_i32, %arg1 : i32, i32
  }
  func.func @transform_3(%arg0: i32, %arg1: i32, %arg2: i32) -> (i32, i32) {
    %c0_i32 = arith.constant 0 : i32
    return %arg0, %arg1 : i32, i32
  }
}

</mosaic_0001>

<llo_original>
// kernel: tpu_custom_call.1
$region0: #{tpu_custom_call.1}
  #allocation0 [shape = 'u32[]', space=smem, size = 0x4, offset = 0x4, fixed_abs, tag = 'smem constant byte address 0x4 - core index']
  #allocation1 [shape = 'u32[144,128]{1,0:T(1,128)}', space=vmem, size = 0x12000, scoped, tag = 'internal scratch']
  #allocation2 [shape = 'f32[128,64]{1,0:T(8,128)}', space=vmem, size = 0x10000, scoped, tag = 'scratch operand']
  %s0 = inlined_call_operand.vmem [shape: bf16[128,196], index: 0, kind: input, shape index: {}]
  %s1 = inlined_call_operand.vmem [shape: bf16[196,64], index: 1, kind: input, shape index: {}]
  %s2 = inlined_call_operand.vmem [shape: f32[1,64], index: 2, kind: input, shape index: {}]
  %s3 = inlined_call_operand.vmem [shape: bf16[128,64], index: 3, kind: output, shape index: {}]
  %s4 = sld [smem:[#allocation0]]
  $region34: #{tpu_custom_call.1} parent=0
    _
  %s6 = ssub.s32 1, %s4
  %s7 = scalar_select 0, %s6, %s4
  // Predicated region
  $region2: #{tpu_custom_call.1} parent=0 // pred_check
    _
  $region3: #{tpu_custom_call.1} parent=0 // pred_check_branch
    %9 = sbr.rel (0) target = $region5
  $region4: #{tpu_custom_call.1} parent=0 // pred_region
    _
  $region5: #{tpu_custom_call.1} parent=0 // pred_fallthru
    _
  // Predicated region
  $region6: #{tpu_custom_call.1} parent=0 // pred_check
    _
  $region7: #{tpu_custom_call.1} parent=0 // pred_check_branch
    %11 = sbr.rel (0) target = $region9
  $region8: #{tpu_custom_call.1} parent=0 // pred_region
    _
  $region9: #{tpu_custom_call.1} parent=0 // pred_fallthru
    _
  // Predicated region
  $region10: #{tpu_custom_call.1} parent=0 // pred_check
    _
  $region11: #{tpu_custom_call.1} parent=0 // pred_check_branch
    %13 = sbr.rel (0) target = $region13
  $region12: #{tpu_custom_call.1} parent=0 // pred_region
    _
  $region13: #{tpu_custom_call.1} parent=0 // pred_fallthru
    _
  %v15 = vld [vmem:[%s0] sm:$0xff]
  %v16 = vld [vmem:[%s0 + $0x8] sm:$0xff]
  %v17 = vld [vmem:[%s0 + $0x10] sm:$0xff]
  %v18 = vld [vmem:[%s0 + $0x18] sm:$0xff]
  %v19 = vld [vmem:[%s0 + $0x20] sm:$0xff]
  %v20 = vld [vmem:[%s0 + $0x28] sm:$0xff]
  %v21 = vld [vmem:[%s0 + $0x30] sm:$0xff]
  %v22 = vld [vmem:[%s0 + $0x38] sm:$0xff]
  %v23 = vld [vmem:[%s0 + $0x40] sm:$0xff]
  %v24 = vld [vmem:[%s0 + $0x48] sm:$0xff]
  %v25 = vld [vmem:[%s0 + $0x50] sm:$0xff]
  %v26 = vld [vmem:[%s0 + $0x58] sm:$0xff]
  %v27 = vld [vmem:[%s0 + $0x60] sm:$0xff]
  %v28 = vld [vmem:[%s0 + $0x68] sm:$0xff]
  %v29 = vld [vmem:[%s0 + $0x70] sm:$0xff]
  %v30 = vld [vmem:[%s0 + $0x78] sm:$0xff]
  %v31 = vld [vmem:[%s1] sm:$0xf]
  %v32 = vld [vmem:[%s1 + $0x4] sm:$0xf]
  %v33 = vld [vmem:[%s1 + $0x8] sm:$0xf]
  %v34 = vld [vmem:[%s1 + $0xc] sm:$0xf]
  %v35 = vld [vmem:[%s1 + $0x10] sm:$0xf]
  %v36 = vld [vmem:[%s1 + $0x14] sm:$0xf]
  %v37 = vld [vmem:[%s1 + $0x18] sm:$0xf]
  %v38 = vld [vmem:[%s1 + $0x1c] sm:$0xf]
  %v39 = vld [vmem:[%s1 + $0x20] sm:$0xf]
  %v40 = vld [vmem:[%s1 + $0x24] sm:$0xf]
  %v41 = vld [vmem:[%s1 + $0x28] sm:$0xf]
  %v42 = vld [vmem:[%s1 + $0x2c] sm:$0xf]
  %v43 = vld [vmem:[%s1 + $0x30] sm:$0xf]
  %v44 = vld [vmem:[%s1 + $0x34] sm:$0xf]
  %v45 = vld [vmem:[%s1 + $0x38] sm:$0xf]
  %v46 = vld [vmem:[%s1 + $0x3c] sm:$0xf]
  %v47 = vld [vmem:[%s1 + $0x40] sm:$0xf]
  %v48 = vld [vmem:[%s1 + $0x44] sm:$0xf]
  %v49 = vld [vmem:[%s1 + $0x48] sm:$0xf]
  %v50 = vld [vmem:[%s1 + $0x4c] sm:$0xf]
  %v51 = vld [vmem:[%s1 + $0x50] sm:$0xf]
  %v52 = vld [vmem:[%s1 + $0x54] sm:$0xf]
  %v53 = vld [vmem:[%s1 + $0x58] sm:$0xf]
  %v54 = vld [vmem:[%s1 + $0x5c] sm:$0xf]
  %v55 = vld [vmem:[%s1 + $0x60] sm:$0x3]
  %v72 = vunpack.c.l.b16 %v15
  %v73 = vunpack.c.h.b16 %v15
  %v74 = vunpack.c.l.b16 %v16
  %v75 = vunpack.c.h.b16 %v16
  %v76 = vunpack.c.l.b16 %v17
  %v77 = vunpack.c.h.b16 %v17
  %v78 = vunpack.c.l.b16 %v18
  %v79 = vunpack.c.h.b16 %v18
  %v80 = vunpack.c.l.b16 %v19
  %v81 = vunpack.c.h.b16 %v19
  %v82 = vunpack.c.l.b16 %v20
  %v83 = vunpack.c.h.b16 %v20
  %v84 = vunpack.c.l.b16 %v21
  %v85 = vunpack.c.h.b16 %v21
  %v86 = vunpack.c.l.b16 %v22
  %v87 = vunpack.c.h.b16 %v22
  %v88 = vunpack.c.l.b16 %v23
  %v89 = vunpack.c.h.b16 %v23
  %v90 = vunpack.c.l.b16 %v24
  %v91 = vunpack.c.h.b16 %v24
  %v92 = vunpack.c.l.b16 %v25
  %v93 = vunpack.c.h.b16 %v25
  %v94 = vunpack.c.l.b16 %v26
  %v95 = vunpack.c.h.b16 %v26
  %v96 = vunpack.c.l.b16 %v27
  %v97 = vunpack.c.h.b16 %v27
  %v98 = vunpack.c.l.b16 %v28
  %v99 = vunpack.c.h.b16 %v28
  %v100 = vunpack.c.l.b16 %v29
  %v101 = vunpack.c.h.b16 %v29
  %v102 = vunpack.c.l.b16 %v30
  %v103 = vunpack.c.h.b16 %v30
  %v104 = vpack.c.b16 %v74, %v72
  %v105 = vpack.c.b16 %v75, %v73
  %v106 = vpack.c.b16 %v78, %v76
  %v107 = vpack.c.b16 %v79, %v77
  %v108 = vpack.c.b16 %v82, %v80
  %v109 = vpack.c.b16 %v83, %v81
  %v110 = vpack.c.b16 %v86, %v84
  %v111 = vpack.c.b16 %v87, %v85
  %v112 = vpack.c.b16 %v90, %v88
  %v113 = vpack.c.b16 %v91, %v89
  %v114 = vpack.c.b16 %v94, %v92
  %v115 = vpack.c.b16 %v95, %v93
  %v116 = vpack.c.b16 %v98, %v96
  %v117 = vpack.c.b16 %v99, %v97
  %v118 = vpack.c.b16 %v102, %v100
  %v119 = vpack.c.b16 %v103, %v101
  %v153 = vunpack.c.l.b16 %v31
  %v154 = vunpack.c.l.b16 %v32
  %v155 = vunpack.c.l.b16 %v33
  %v156 = vunpack.c.l.b16 %v34
  %v157 = vunpack.c.l.b16 %v35
  %v158 = vunpack.c.l.b16 %v36
  %v159 = vunpack.c.l.b16 %v37
  %v160 = vunpack.c.l.b16 %v38
  %v161 = vunpack.c.l.b16 %v39
  %v162 = vunpack.c.l.b16 %v40
  %v163 = vunpack.c.l.b16 %v41
  %v164 = vunpack.c.l.b16 %v42
  %v165 = vunpack.c.l.b16 %v43
  %v166 = vunpack.c.l.b16 %v44
  %v167 = vunpack.c.l.b16 %v45
  %v168 = vunpack.c.l.b16 %v46
  %v169 = vunpack.c.l.b16 %v47
  %v170 = vunpack.c.l.b16 %v48
  %v171 = vunpack.c.l.b16 %v49
  %v172 = vunpack.c.l.b16 %v50
  %v173 = vunpack.c.l.b16 %v51
  %v174 = vunpack.c.l.b16 %v52
  %v175 = vunpack.c.l.b16 %v53
  %v176 = vunpack.c.l.b16 %v54
  %v177 = vunpack.c.l.b16 %v55
  %v178 = vpack.c.b16 %v154, %v153
  %v179 = vpack.c.b16 %v156, %v155
  %v180 = vpack.c.b16 %v158, %v157
  %v181 = vpack.c.b16 %v160, %v159
  %v182 = vpack.c.b16 %v162, %v161
  %v183 = vpack.c.b16 %v164, %v163
  %v184 = vpack.c.b16 %v166, %v165
  %v185 = vpack.c.b16 %v168, %v167
  %v186 = vpack.c.b16 %v170, %v169
  %v187 = vpack.c.b16 %v172, %v171
  %v188 = vpack.c.b16 %v174, %v173
  %v189 = vpack.c.b16 %v176, %v175
  %v190 = vpack.c.b16 %v177, %v177
  %vm203 = vcmask 556032
  %v205 = vsel %vm203, %v105, 0
  %v208 = vsel %vm203, %v107, 0
  %v211 = vsel %vm203, %v109, 0
  %v214 = vsel %vm203, %v111, 0
  %v217 = vsel %vm203, %v113, 0
  %v220 = vsel %vm203, %v115, 0
  %v223 = vsel %vm203, %v117, 0
  %v226 = vsel %vm203, %v119, 0
  %vm228 = vcmask 1041408
  %v230 = vsel %vm228, %v190, 0
  %232 = vmatprep.subr.bf16.mxu0 0
  %233 = vmatpush1.bf16.msra.mxu0 %v178
  %234 = vmatprep.subr.bf16.mxu0 0
  %235 = vmatpush1.bf16.msra.mxu0 %v179
  %236 = vmatprep.subr.bf16.mxu0 0
  %237 = vmatpush1.bf16.msra.mxu0 %v180
  %238 = vmatprep.subr.bf16.mxu0 0
  %239 = vmatpush1.bf16.msra.mxu0 %v181
  %240 = vmatprep.subr.bf16.mxu0 0
  %241 = vmatpush1.bf16.msra.mxu0 %v182
  %242 = vmatprep.subr.bf16.mxu0 0
  %243 = vmatpush1.bf16.msra.mxu0 %v183
  %244 = vmatprep.subr.bf16.mxu0 0
  %245 = vmatpush1.bf16.msra.mxu0 %v184
  %246 = vmatprep.subr.bf16.mxu0 0
  %247 = vmatpush1.bf16.msra.mxu0 %v185
  %248 = vmatprep.subr.bf16.mxu0 0
  %249 = vmatpush1.bf16.msra.mxu0 %v186
  %250 = vmatprep.subr.bf16.mxu0 0
  %251 = vmatpush1.bf16.msra.mxu0 %v187
  %252 = vmatprep.subr.bf16.mxu0 0
  %253 = vmatpush1.bf16.msra.mxu0 %v188
  %254 = vmatprep.subr.bf16.mxu0 0
  %255 = vmatpush1.bf16.msra.mxu0 %v189
  %256 = vmatprep.subr.bf16.mxu0 0
  %257 = vmatpush1.bf16.msra.mxu0 %v230
  %258 = vmatprep.subr.bf16.mxu0 0
  %259 = vmatpush1.bf16.msra.mxu0 0
  %260 = vmatprep.subr.bf16.mxu0 0
  %261 = vmatpush1.bf16.msra.mxu0 0
  %262 = vmatprep.subr.bf16.mxu0 0
  %263 = vmatpush1.bf16.msra.mxu0 0
  %264 = vmatprep.mubr.bf16.mxu0 %v205
  %265 = vmatmul.mubr.bf16.gmra.mrb[0].mxu0 %v104
  %v266 = vpop.f32.mrb[0].mxu0
  %v267 = vadd.f32 0.0, %v266
  %v268 = vpop.f32.mrb[0].mxu0
  %v269 = vpop.f32.mrb[0].mxu0
  %v270 = vadd.f32 0.0, %v269
  %v271 = vpop.f32.mrb[0].mxu0
  %272 = vmatprep.mubr.bf16.mxu0 %v208
  %273 = vmatmul.mubr.bf16.gmra.mrb[0].mxu0 %v106
  %v274 = vpop.f32.mrb[0].mxu0
  %v275 = vadd.f32 0.0, %v274
  %v276 = vpop.f32.mrb[0].mxu0
  %v277 = vpop.f32.mrb[0].mxu0
  %v278 = vadd.f32 0.0, %v277
  %v279 = vpop.f32.mrb[0].mxu0
  %280 = vmatprep.mubr.bf16.mxu0 %v211
  %281 = vmatmul.mubr.bf16.gmra.mrb[0].mxu0 %v108
  %v282 = vpop.f32.mrb[0].mxu0
  %v283 = vadd.f32 0.0, %v282
  %v284 = vpop.f32.mrb[0].mxu0
  %v285 = vpop.f32.mrb[0].mxu0
  %v286 = vadd.f32 0.0, %v285
  %v287 = vpop.f32.mrb[0].mxu0
  %288 = vmatprep.mubr.bf16.mxu0 %v214
  %289 = vmatmul.mubr.bf16.gmra.mrb[0].mxu0 %v110
  %v290 = vpop.f32.mrb[0].mxu0
  %v291 = vadd.f32 0.0, %v290
  %v292 = vpop.f32.mrb[0].mxu0
  %v293 = vpop.f32.mrb[0].mxu0
  %v294 = vadd.f32 0.0, %v293
  %v295 = vpop.f32.mrb[0].mxu0
  %296 = vmatprep.mubr.bf16.mxu0 %v217
  %297 = vmatmul.mubr.bf16.gmra.mrb[0].mxu0 %v112
  %v298 = vpop.f32.mrb[0].mxu0
  %v299 = vadd.f32 0.0, %v298
  %v300 = vpop.f32.mrb[0].mxu0
  %v301 = vpop.f32.mrb[0].mxu0
  %v302 = vadd.f32 0.0, %v301
  %v303 = vpop.f32.mrb[0].mxu0
  %304 = vmatprep.mubr.bf16.mxu0 %v220
  %305 = vmatmul.mubr.bf16.gmra.mrb[0].mxu0 %v114
  %v306 = vpop.f32.mrb[0].mxu0
  %v307 = vadd.f32 0.0, %v306
  %v308 = vpop.f32.mrb[0].mxu0
  %v309 = vpop.f32.mrb[0].mxu0
  %v310 = vadd.f32 0.0, %v309
  %v311 = vpop.f32.mrb[0].mxu0
  %312 = vmatprep.mubr.bf16.mxu0 %v223
  %313 = vmatmul.mubr.bf16.gmra.mrb[0].mxu0 %v116
  %v314 = vpop.f32.mrb[0].mxu0
  %v315 = vadd.f32 0.0, %v314
  %v316 = vpop.f32.mrb[0].mxu0
  %v317 = vpop.f32.mrb[0].mxu0
  %v318 = vadd.f32 0.0, %v317
  %v319 = vpop.f32.mrb[0].mxu0
  %320 = vmatprep.mubr.bf16.mxu0 %v226
  %321 = vmatmul.mubr.bf16.gmra.mrb[0].mxu0 %v118
  %v322 = vpop.f32.mrb[0].mxu0
  %v323 = vadd.f32 0.0, %v322
  %v324 = vpop.f32.mrb[0].mxu0
  %v325 = vpop.f32.mrb[0].mxu0
  %v326 = vadd.f32 0.0, %v325
  %v327 = vpop.f32.mrb[0].mxu0
  %328 = vdwg.mxu0
  %p329 = scmp.eq.s32.totalorder 0, 0
  // Predicated region
  $region14: #{tpu_custom_call.1} parent=0 // pred_check
    %p330 = pneg %p329
  $region15: #{tpu_custom_call.1} parent=0 // pred_check_branch
    %332 = sbr.rel (%p330) target = $region17
  $region16: #{tpu_custom_call.1} parent=0 // pred_region
    %vm333 = vcmask 523264
    %334 = vst.msk [vmem:[#allocation2] sm:$0xff] %vm333, %v267
    %335 = vst.msk [vmem:[#allocation2 + $0x8] sm:$0xff] %vm333, %v270
    %336 = vst.msk [vmem:[#allocation2 + $0x10] sm:$0xff] %vm333, %v275
    %337 = vst.msk [vmem:[#allocation2 + $0x18] sm:$0xff] %vm333, %v278
    %338 = vst.msk [vmem:[#allocation2 + $0x20] sm:$0xff] %vm333, %v283
    %339 = vst.msk [vmem:[#allocation2 + $0x28] sm:$0xff] %vm333, %v286
    %340 = vst.msk [vmem:[#allocation2 + $0x30] sm:$0xff] %vm333, %v291
    %341 = vst.msk [vmem:[#allocation2 + $0x38] sm:$0xff] %vm333, %v294
    %342 = vst.msk [vmem:[#allocation2 + $0x40] sm:$0xff] %vm333, %v299
    %343 = vst.msk [vmem:[#allocation2 + $0x48] sm:$0xff] %vm333, %v302
    %344 = vst.msk [vmem:[#allocation2 + $0x50] sm:$0xff] %vm333, %v307
    %345 = vst.msk [vmem:[#allocation2 + $0x58] sm:$0xff] %vm333, %v310
    %346 = vst.msk [vmem:[#allocation2 + $0x60] sm:$0xff] %vm333, %v315
    %347 = vst.msk [vmem:[#allocation2 + $0x68] sm:$0xff] %vm333, %v318
    %348 = vst.msk [vmem:[#allocation2 + $0x70] sm:$0xff] %vm333, %v323
    %349 = vst.msk [vmem:[#allocation2 + $0x78] sm:$0xff] %vm333, %v326
  $region17: #{tpu_custom_call.1} parent=0 // pred_fallthru
    _
  %p350 = scmp.gt.s32.totalorder 0, 0
  // Predicated region
  $region18: #{tpu_custom_call.1} parent=0 // pred_check
    %p351 = pneg %p350
  $region19: #{tpu_custom_call.1} parent=0 // pred_check_branch
    %353 = sbr.rel (%p351) target = $region21
  $region20: #{tpu_custom_call.1} parent=0 // pred_region
    %v354 = vld [vmem:[#allocation2] sm:$0xff]
    %v355 = vld [vmem:[#allocation2 + $0x8] sm:$0xff]
    %v356 = vld [vmem:[#allocation2 + $0x10] sm:$0xff]
    %v357 = vld [vmem:[#allocation2 + $0x18] sm:$0xff]
    %v358 = vld [vmem:[#allocation2 + $0x20] sm:$0xff]
    %v359 = vld [vmem:[#allocation2 + $0x28] sm:$0xff]
    %v360 = vld [vmem:[#allocation2 + $0x30] sm:$0xff]
    %v361 = vld [vmem:[#allocation2 + $0x38] sm:$0xff]
    %v362 = vld [vmem:[#allocation2 + $0x40] sm:$0xff]
    %v363 = vld [vmem:[#allocation2 + $0x48] sm:$0xff]
    %v364 = vld [vmem:[#allocation2 + $0x50] sm:$0xff]
    %v365 = vld [vmem:[#allocation2 + $0x58] sm:$0xff]
    %v366 = vld [vmem:[#allocation2 + $0x60] sm:$0xff]
    %v367 = vld [vmem:[#allocation2 + $0x68] sm:$0xff]
    %v368 = vld [vmem:[#allocation2 + $0x70] sm:$0xff]
    %v369 = vld [vmem:[#allocation2 + $0x78] sm:$0xff]
    %v370 = vadd.f32 %v354, %v267
    %v371 = vadd.f32 %v355, %v270
    %v372 = vadd.f32 %v356, %v275
    %v373 = vadd.f32 %v357, %v278
    %v374 = vadd.f32 %v358, %v283
    %v375 = vadd.f32 %v359, %v286
    %v376 = vadd.f32 %v360, %v291
    %v377 = vadd.f32 %v361, %v294
    %v378 = vadd.f32 %v362, %v299
    %v379 = vadd.f32 %v363, %v302
    %v380 = vadd.f32 %v364, %v307
    %v381 = vadd.f32 %v365, %v310
    %v382 = vadd.f32 %v366, %v315
    %v383 = vadd.f32 %v367, %v318
    %v384 = vadd.f32 %v368, %v323
    %v385 = vadd.f32 %v369, %v326
    %vm386 = vcmask 523264
    %387 = vst.msk [vmem:[#allocation2] sm:$0xff] %vm386, %v370
    %388 = vst.msk [vmem:[#allocation2 + $0x8] sm:$0xff] %vm386, %v371
    %389 = vst.msk [vmem:[#allocation2 + $0x10] sm:$0xff] %vm386, %v372
    %390 = vst.msk [vmem:[#allocation2 + $0x18] sm:$0xff] %vm386, %v373
    %391 = vst.msk [vmem:[#allocation2 + $0x20] sm:$0xff] %vm386, %v374
    %392 = vst.msk [vmem:[#allocation2 + $0x28] sm:$0xff] %vm386, %v375
    %393 = vst.msk [vmem:[#allocation2 + $0x30] sm:$0xff] %vm386, %v376
    %394 = vst.msk [vmem:[#allocation2 + $0x38] sm:$0xff] %vm386, %v377
    %395 = vst.msk [vmem:[#allocation2 + $0x40] sm:$0xff] %vm386, %v378
    %396 = vst.msk [vmem:[#allocation2 + $0x48] sm:$0xff] %vm386, %v379
    %397 = vst.msk [vmem:[#allocation2 + $0x50] sm:$0xff] %vm386, %v380
    %398 = vst.msk [vmem:[#allocation2 + $0x58] sm:$0xff] %vm386, %v381
    %399 = vst.msk [vmem:[#allocation2 + $0x60] sm:$0xff] %vm386, %v382
    %400 = vst.msk [vmem:[#allocation2 + $0x68] sm:$0xff] %vm386, %v383
    %401 = vst.msk [vmem:[#allocation2 + $0x70] sm:$0xff] %vm386, %v384
    %402 = vst.msk [vmem:[#allocation2 + $0x78] sm:$0xff] %vm386, %v385
  $region21: #{tpu_custom_call.1} parent=0 // pred_fallthru
    _
  // Predicated region
  $region22: #{tpu_custom_call.1} parent=0 // pred_check
    %p403 = pneg %p329
  $region23: #{tpu_custom_call.1} parent=0 // pred_check_branch
    %405 = sbr.rel (%p403) target = $region25
  $region24: #{tpu_custom_call.1} parent=0 // pred_region
    %v406 = vld [vmem:[#allocation2] sm:$0xff]
    %v407 = vld [vmem:[#allocation2 + $0x8] sm:$0xff]
    %v408 = vld [vmem:[#allocation2 + $0x10] sm:$0xff]
    %v409 = vld [vmem:[#allocation2 + $0x18] sm:$0xff]
    %v410 = vld [vmem:[#allocation2 + $0x20] sm:$0xff]
    %v411 = vld [vmem:[#allocation2 + $0x28] sm:$0xff]
    %v412 = vld [vmem:[#allocation2 + $0x30] sm:$0xff]
    %v413 = vld [vmem:[#allocation2 + $0x38] sm:$0xff]
    %v414 = vld [vmem:[#allocation2 + $0x40] sm:$0xff]
    %v415 = vld [vmem:[#allocation2 + $0x48] sm:$0xff]
    %v416 = vld [vmem:[#allocation2 + $0x50] sm:$0xff]
    %v417 = vld [vmem:[#allocation2 + $0x58] sm:$0xff]
    %v418 = vld [vmem:[#allocation2 + $0x60] sm:$0xff]
    %v419 = vld [vmem:[#allocation2 + $0x68] sm:$0xff]
    %v420 = vld [vmem:[#allocation2 + $0x70] sm:$0xff]
    %v421 = vld [vmem:[#allocation2 + $0x78] sm:$0xff]
    %v422 = vld [vmem:[%s2] sm:$0x1]
    %v424 = vlaneseq
    %v425 = vshrl.u32 %v424, 7
    %v426 = vsub.s32 0, %v425
    %v427 = vrot.slane %v422, %v426
    %v429 = vadd.f32 %v406, %v427
    %v430 = vadd.f32 %v407, %v427
    %v431 = vadd.f32 %v408, %v427
    %v432 = vadd.f32 %v409, %v427
    %v433 = vadd.f32 %v410, %v427
    %v434 = vadd.f32 %v411, %v427
    %v435 = vadd.f32 %v412, %v427
    %v436 = vadd.f32 %v413, %v427
    %v437 = vadd.f32 %v414, %v427
    %v438 = vadd.f32 %v415, %v427
    %v439 = vadd.f32 %v416, %v427
    %v440 = vadd.f32 %v417, %v427
    %v441 = vadd.f32 %v418, %v427
    %v442 = vadd.f32 %v419, %v427
    %v443 = vadd.f32 %v420, %v427
    %v444 = vadd.f32 %v421, %v427
    %v445 = vmax.f32 %v429, 0.0
    %v446 = vmax.f32 %v430, 0.0
    %v447 = vmax.f32 %v431, 0.0
    %v448 = vmax.f32 %v432, 0.0
    %v449 = vmax.f32 %v433, 0.0
    %v450 = vmax.f32 %v434, 0.0
    %v451 = vmax.f32 %v435, 0.0
    %v452 = vmax.f32 %v436, 0.0
    %v453 = vmax.f32 %v437, 0.0
    %v454 = vmax.f32 %v438, 0.0
    %v455 = vmax.f32 %v439, 0.0
    %v456 = vmax.f32 %v440, 0.0
    %v457 = vmax.f32 %v441, 0.0
    %v458 = vmax.f32 %v442, 0.0
    %v459 = vmax.f32 %v443, 0.0
    %v460 = vmax.f32 %v444, 0.0
    %v461 = vpack.c.bf16 %v446, %v445
    %v462 = vpack.c.bf16 %v448, %v447
    %v463 = vpack.c.bf16 %v450, %v449
    %v464 = vpack.c.bf16 %v452, %v451
    %v465 = vpack.c.bf16 %v454, %v453
    %v466 = vpack.c.bf16 %v456, %v455
    %v467 = vpack.c.bf16 %v458, %v457
    %v468 = vpack.c.bf16 %v460, %v459
    %v477 = vunpack.c.l.b16 %v461
    %v478 = vunpack.c.h.b16 %v461
    %v479 = vunpack.c.l.b16 %v462
    %v480 = vunpack.c.h.b16 %v462
    %v481 = vunpack.c.l.b16 %v463
    %v482 = vunpack.c.h.b16 %v463
    %v483 = vunpack.c.l.b16 %v464
    %v484 = vunpack.c.h.b16 %v464
    %v485 = vunpack.c.l.b16 %v465
    %v486 = vunpack.c.h.b16 %v465
    %v487 = vunpack.c.l.b16 %v466
    %v488 = vunpack.c.h.b16 %v466
    %v489 = vunpack.c.l.b16 %v467
    %v490 = vunpack.c.h.b16 %v467
    %v491 = vunpack.c.l.b16 %v468
    %v492 = vunpack.c.h.b16 %v468
    %v493 = vpack.c.b16 %v477, %v477
    %v494 = vpack.c.b16 %v478, %v478
    %v495 = vpack.c.b16 %v479, %v479
    %v496 = vpack.c.b16 %v480, %v480
    %v497 = vpack.c.b16 %v481, %v481
    %v498 = vpack.c.b16 %v482, %v482
    %v499 = vpack.c.b16 %v483, %v483
    %v500 = vpack.c.b16 %v484, %v484
    %v501 = vpack.c.b16 %v485, %v485
    %v502 = vpack.c.b16 %v486, %v486
    %v503 = vpack.c.b16 %v487, %v487
    %v504 = vpack.c.b16 %v488, %v488
    %v505 = vpack.c.b16 %v489, %v489
    %v506 = vpack.c.b16 %v490, %v490
    %v507 = vpack.c.b16 %v491, %v491
    %v508 = vpack.c.b16 %v492, %v492
    %vm525 = vcmask 519168
    %526 = vst.msk [vmem:[%s3] sm:$0xf] %vm525, %v493
    %527 = vst.msk [vmem:[%s3 + $0x4] sm:$0xf] %vm525, %v494
    %528 = vst.msk [vmem:[%s3 + $0x8] sm:$0xf] %vm525, %v495
    %529 = vst.msk [vmem:[%s3 + $0xc] sm:$0xf] %vm525, %v496
    %530 = vst.msk [vmem:[%s3 + $0x10] sm:$0xf] %vm525, %v497
    %531 = vst.msk [vmem:[%s3 + $0x14] sm:$0xf] %vm525, %v498
    %532 = vst.msk [vmem:[%s3 + $0x18] sm:$0xf] %vm525, %v499
    %533 = vst.msk [vmem:[%s3 + $0x1c] sm:$0xf] %vm525, %v500
    %534 = vst.msk [vmem:[%s3 + $0x20] sm:$0xf] %vm525, %v501
    %535 = vst.msk [vmem:[%s3 + $0x24] sm:$0xf] %vm525, %v502
    %536 = vst.msk [vmem:[%s3 + $0x28] sm:$0xf] %vm525, %v503
    %537 = vst.msk [vmem:[%s3 + $0x2c] sm:$0xf] %vm525, %v504
    %538 = vst.msk [vmem:[%s3 + $0x30] sm:$0xf] %vm525, %v505
    %539 = vst.msk [vmem:[%s3 + $0x34] sm:$0xf] %vm525, %v506
    %540 = vst.msk [vmem:[%s3 + $0x38] sm:$0xf] %vm525, %v507
    %541 = vst.msk [vmem:[%s3 + $0x3c] sm:$0xf] %vm525, %v508
  $region25: #{tpu_custom_call.1} parent=0 // pred_fallthru
    _
  // Predicated region
  $region26: #{tpu_custom_call.1} parent=0 // pred_check
    _
  $region27: #{tpu_custom_call.1} parent=0 // pred_check_branch
    %543 = sbr.rel (0) target = $region29
  $region28: #{tpu_custom_call.1} parent=0 // pred_region
    _
  $region29: #{tpu_custom_call.1} parent=0 // pred_fallthru
    _
  // Predicated region
  $region30: #{tpu_custom_call.1} parent=0 // pred_check
    _
  $region31: #{tpu_custom_call.1} parent=0 // pred_check_branch
    %545 = sbr.rel (0) target = $region33
  $region32: #{tpu_custom_call.1} parent=0 // pred_region
    _
  $region33: #{tpu_custom_call.1} parent=0 // pred_fallthru
    _

</llo_original>
